<compile_context>
chip_gen: v5e
topology: v5e:2x2
jax: 0.10.0
libtpu: 0.0.40
codegen_flags: <defaults>
</compile_context>

<pallas_src>
import functools

import jax
import jax.numpy as jnp
from jax import lax
from jax.experimental import pallas as pl
from jax.experimental.pallas import tpu as pltpu

_LANES = 128
_SUBLANES = 8
_SUB_ROWS = 512  # inner accumulation sub-chunk (512x128 f32 = 256 KiB live per operand)


def _chip_config():
    """(tile_rows, num_splits, vmem_limit_bytes) per TPU generation, safe fallback."""
    kind = ""
    try:
        kind = jax.devices()[0].device_kind.lower()
    except Exception:
        pass
    if "v7" in kind:
        # 2 TensorCores/chip, 64 MiB VMEM per TC: 4096-row f32 tiles -> 8 MiB pipeline/TC.
        return 4096, 2, None
    if "v6" in kind:
        # 1 TC, 128 MiB physical VMEM: larger tiles, raise the scoped-VMEM limit.
        return 8192, 1, 64 * 1024 * 1024
    # v5e / unknown: 16 MiB scoped default -> keep pipeline at 8 MiB.
    return 4096, 1, None


def _sse_kernel(a_ref, b_ref, out_ref, *, tile_rows, sub_rows, rows, bps):
    """Accumulates a per-split (8,128) partial sum of squared errors."""
    c = pl.program_id(0)   # parallel split index (one per TensorCore on v7x)
    i = pl.program_id(1)   # reduction step within the split

    @pl.when(i == 0)
    def _init():
        out_ref[...] = jnp.zeros_like(out_ref)

    # Global block index; the last split may replay the last block (clamped in the
    # index_map) — it then has valid <= 0 and contributes 0 via the masked path.
    g = c * bps + i
    valid = rows - g * tile_rows          # rows of this tile that are real data
    n_sub = tile_rows // sub_rows

    def _sub_sse(j, mask_rows):
        r0 = pl.multiple_of(j * sub_rows, _SUBLANES)
        a = a_ref[pl.ds(r0, sub_rows), :].astype(jnp.float32)
        b = b_ref[pl.ds(r0, sub_rows), :].astype(jnp.float32)
        d = a - b
        dsq = d * d
        if mask_rows:
            row_ids = lax.broadcasted_iota(jnp.int32, (sub_rows, 1), 0) + j * sub_rows
            dsq = jnp.where(row_ids < valid, dsq, 0.0)
        # Layout-preserving fold onto a vreg-shaped (8,128) partial: pure VPU adds.
        return dsq.reshape(sub_rows // _SUBLANES, _SUBLANES, _LANES).sum(axis=0)

    acc0 = jnp.zeros((_SUBLANES, _LANES), jnp.float32)

    @pl.when(valid >= tile_rows)       # hot path: fully-valid tile, no mask work
    def _full_tile():
        acc = lax.fori_loop(0, n_sub, lambda j, acc: acc + _sub_sse(j, False),
                            acc0, unroll=True)
        out_ref[...] += acc

    @pl.when(valid < tile_rows)        # cold path: partial last block / overflow replay
    def _partial_tile():
        acc = lax.fori_loop(0, n_sub, lambda j, acc: acc + _sub_sse(j, True),
                            acc0, unroll=True)
        out_ref[...] += acc


def psnr_loss(img1: jax.Array, img2: jax.Array) -> jax.Array:
    """Pallas implementation of PSNRLoss.forward. Returns an f32 scalar."""
    assert img1.shape == img2.shape, "img1/img2 must have identical shapes"
    # Note: mixed input dtypes are allowed; both are cast to f32 inside the kernel.
    n = img1.size

    a = img1.reshape(-1)
    b = img2.reshape(-1)

    chunk = _SUBLANES * _LANES
    n_main = (n // chunk) * chunk

    tail_sse = jnp.float32(0.0)
    if n_main == 0:
        # Tiny input (< 1024 elems): padding both is negligible; zeros contribute 0.
        pad = chunk - n
        a_main = jnp.pad(a, (0, pad))
        b_main = jnp.pad(b, (0, pad))
        n_main = chunk
    else:
        a_main = a[:n_main] if n_main < n else a
        b_main = b[:n_main] if n_main < n else b
        if n_main < n:
            # <1024-element tail handled in plain JAX — avoids re-materializing both
            # full inputs via jnp.pad (which doubled HBM traffic on odd sizes).
            at = a[n_main:].astype(jnp.float32)
            bt = b[n_main:].astype(jnp.float32)
            tail_sse = jnp.sum((at - bt) ** 2)

    rows = n_main // _LANES              # multiple of 8, >= 8
    a2 = a_main.reshape(rows, _LANES)
    b2 = b_main.reshape(rows, _LANES)

    tile_target, split_target, vmem_limit = _chip_config()

    tile_rows = min(tile_target, rows)                       # both multiples of 8
    sub_rows = _SUB_ROWS if tile_rows % _SUB_ROWS == 0 else tile_rows
    nblocks = (rows + tile_rows - 1) // tile_rows
    num_splits = min(split_target, nblocks)
    bps = (nblocks + num_splits - 1) // num_splits           # blocks per split

    def in_map(c, i):
        # Clamp so an overflowing last-split step never DMAs a fully-OOB block;
        # the in-kernel masked path zeroes its contribution.
        return (jnp.minimum(c * bps + i, nblocks - 1), 0)

    kernel = functools.partial(_sse_kernel, tile_rows=tile_rows,
                               sub_rows=sub_rows, rows=rows, bps=bps)

    cost = pl.CostEstimate(
        flops=3 * n_main,
        transcendentals=0,
        bytes_accessed=(n_main * jnp.dtype(img1.dtype).itemsize
                        + n_main * jnp.dtype(img2.dtype).itemsize
                        + num_splits * _SUBLANES * _LANES * 4),
    )

    partials = pl.pallas_call(
        kernel,
        out_shape=jax.ShapeDtypeStruct((num_splits * _SUBLANES, _LANES), jnp.float32),
        grid_spec=pltpu.PrefetchScalarGridSpec(
            num_scalar_prefetch=0,
            grid=(num_splits, bps),
            in_specs=[
                pl.BlockSpec((tile_rows, _LANES), in_map),
                pl.BlockSpec((tile_rows, _LANES), in_map),
            ],
            out_specs=pl.BlockSpec((_SUBLANES, _LANES), lambda c, i: (c, 0)),
        ),
        compiler_params=pltpu.CompilerParams(
            dimension_semantics=("parallel", "arbitrary"),
            vmem_limit_bytes=vmem_limit,
        ),
        cost_estimate=cost,
    )(a2, b2)

    # Tiny epilogue in plain JAX: sum the per-split vreg partials, then PSNR.
    sse = jnp.sum(partials) + tail_sse
    mse = sse / jnp.float32(n)
    # psnr = 20*log10(255/sqrt(mse)) = 10*(log(255^2) - log(mse)) / log(10)
    psnr = 10.0 * (jnp.log(jnp.float32(255.0 * 255.0)) - jnp.log(mse)) / jnp.log(
        jnp.float32(10.0))
    # TODO(synk): mse == 0 (identical images) gives psnr = +inf and loss = 0.0 here,
    # whereas the PyTorch module's math.log10 path would blow up; confirm desired.
    return 1.0 / psnr


def psnr_loss_ref(img1, img2):
    """Pure-JAX reference mirroring the PyTorch math."""
    mse = jnp.mean((img1.astype(jnp.float32) - img2.astype(jnp.float32)) ** 2)
    psnr = 20.0 * jnp.log10(255.0 / jnp.sqrt(mse))
    return 1.0 / psnr


if __name__ == "__main__":
    key = jax.random.PRNGKey(0)
    k1, k2, k3, k4, k5, k6 = jax.random.split(key, 6)

    # NCHW like the PyTorch module: batch=2, channels=4, spatial=16x16.
    img1 = jax.random.uniform(k1, (2, 4, 16, 16), dtype=jnp.float32) * 255.0
    img2 = jax.random.uniform(k2, (2, 4, 16, 16), dtype=jnp.float32) * 255.0
    out = jax.block_until_ready(psnr_loss(img1, img2))
    ref = psnr_loss_ref(img1, img2)
    assert jnp.allclose(out, ref, rtol=1e-4, atol=1e-6), (out, ref)

    # Odd shape (not a multiple of 1024) to exercise the plain-JAX tail path.
    img3 = jax.random.uniform(k3, (2, 3, 15, 17), dtype=jnp.float32) * 255.0
    img4 = jax.random.uniform(k4, (2, 3, 15, 17), dtype=jnp.float32) * 255.0
    out2 = jax.block_until_ready(psnr_loss(img3, img4))
    ref2 = psnr_loss_ref(img3, img4)
    assert jnp.allclose(out2, ref2, rtol=1e-4, atol=1e-6), (out2, ref2)

    # Medium shape: multiple tiles + a partial last tile (masked cold path).
    img5 = jax.random.uniform(k5, (2, 4, 512, 300), dtype=jnp.float32) * 255.0
    img6 = jax.random.uniform(k6, (2, 4, 512, 300), dtype=jnp.float32) * 255.0
    out3 = jax.block_until_ready(psnr_loss(img5, img6))
    ref3 = psnr_loss_ref(img5, img6)
    assert jnp.allclose(out3, ref3, rtol=1e-4, atol=1e-6), (out3, ref3)

    print("KERNEL_OK")
</pallas_src>

<mosaic_0001>
module attributes {stable_mosaic.version = 11 : i64} {
  func.func @_sse_kernel(%arg0: i32, %arg1: i32, %arg2: memref<16x128xf32, #tpu.memory_space<vmem>>, %arg3: memref<16x128xf32, #tpu.memory_space<vmem>>, %arg4: memref<8x128xf32, #tpu.memory_space<vmem>>) attributes {dimension_semantics = [#tpu.dimension_semantics<parallel>, #tpu.dimension_semantics<arbitrary>], iteration_bounds = array<i64: 1, 1>, scalar_prefetch = 0 : i64, scratch_operands = 0 : i64, tpu.core_type = #tpu.core_type<tc>, window_params = [{transform_indices = @transform_0, window_bounds = array<i64: 16, 128>}, {transform_indices = @transform_1, window_bounds = array<i64: 16, 128>}, {transform_indices = @transform_2, window_bounds = array<i64: 8, 128>}]} {
    %c0_i32 = arith.constant 0 : i32
    %0 = arith.cmpi eq, %arg1, %c0_i32 : i32
    %1 = arith.extui %0 : i1 to i32
    %c0_i32_0 = arith.constant 0 : i32
    %2 = arith.cmpi ne, %1, %c0_i32_0 : i32
    scf.if %2 {
      %cst_6 = arith.constant 0.000000e+00 : f32
      %14 = vector.broadcast %cst_6 : f32 to vector<8x128xf32>
      %c0 = arith.constant 0 : index
      %c0_7 = arith.constant 0 : index
      %15 = vector.load %arg4[%c0, %c0_7] : memref<8x128xf32, #tpu.memory_space<vmem>>, vector<8x128xf32>
      tpu.vector_store %arg4[%c0, %c0_7], %14 {strides = array<i32>} : memref<8x128xf32, #tpu.memory_space<vmem>>, vector<8x128xf32>,
    } else {
    }
    %c1_i32 = arith.constant 1 : i32
    %3 = arith.muli %arg0, %c1_i32 : i32
    %4 = arith.addi %3, %arg1 : i32
    %c16_i32 = arith.constant 16 : i32
    %5 = arith.muli %4, %c16_i32 : i32
    %c16_i32_1 = arith.constant 16 : i32
    %6 = arith.subi %c16_i32_1, %5 : i32
    %cst = arith.constant 0.000000e+00 : f32
    %7 = vector.broadcast %cst : f32 to vector<8x128xf32>
    %c16_i32_2 = arith.constant 16 : i32
    %8 = arith.cmpi sge, %6, %c16_i32_2 : i32
    %9 = arith.extui %8 : i1 to i32
    %c0_i32_3 = arith.constant 0 : i32
    %10 = arith.cmpi ne, %9, %c0_i32_3 : i32
    scf.if %10 {
      %c0_i32_6 = arith.constant 0 : i32
      %c16_i32_7 = arith.constant 16 : i32
      %14 = arith.muli %c0_i32_6, %c16_i32_7 : i32
      %15 = tpu.assume_multiple %14, 8 : i32
      %16 = arith.index_cast %15 : i32 to index
      %c0 = arith.constant 0 : index
      %17 = vector.load %arg2[%16, %c0] : memref<16x128xf32, #tpu.memory_space<vmem>>, vector<16x128xf32>
      %18 = arith.index_cast %15 : i32 to index
      %c0_8 = arith.constant 0 : index
      %19 = vector.load %arg3[%18, %c0_8] : memref<16x128xf32, #tpu.memory_space<vmem>>, vector<16x128xf32>
      %20 = arith.subf %17, %19 : vector<16x128xf32>
      %21 = arith.mulf %20, %20 : vector<16x128xf32>
      %22 = vector.shape_cast %21 : vector<16x128xf32> to vector<2x8x128xf32>
      %cst_9 = arith.constant dense<0.000000e+00> : vector<8x128xf32>
      %23 = vector.multi_reduction <add>, %22, %cst_9 [0] : vector<2x8x128xf32> to vector<8x128xf32>
      %24 = arith.addf %7, %23 : vector<8x128xf32>
      %c1_i32_10 = arith.constant 1 : i32
      %c0_11 = arith.constant 0 : index
      %c0_12 = arith.constant 0 : index
      %25 = vector.load %arg4[%c0_11, %c0_12] : memref<8x128xf32, #tpu.memory_space<vmem>>, vector<8x128xf32>
      %26 = arith.addf %25, %24 : vector<8x128xf32>
      %c0_13 = arith.constant 0 : index
      %c0_14 = arith.constant 0 : index
      %27 = vector.load %arg4[%c0_13, %c0_14] : memref<8x128xf32, #tpu.memory_space<vmem>>, vector<8x128xf32>
      tpu.vector_store %arg4[%c0_13, %c0_14], %26 {strides = array<i32>} : memref<8x128xf32, #tpu.memory_space<vmem>>, vector<8x128xf32>,
    } else {
    }
    %c16_i32_4 = arith.constant 16 : i32
    %11 = arith.cmpi slt, %6, %c16_i32_4 : i32
    %12 = arith.extui %11 : i1 to i32
    %c0_i32_5 = arith.constant 0 : i32
    %13 = arith.cmpi ne, %12, %c0_i32_5 : i32
    scf.if %13 {
      %c0_i32_6 = arith.constant 0 : i32
      %c16_i32_7 = arith.constant 16 : i32
      %14 = arith.muli %c0_i32_6, %c16_i32_7 : i32
      %15 = tpu.assume_multiple %14, 8 : i32
      %16 = arith.index_cast %15 : i32 to index
      %c0 = arith.constant 0 : index
      %17 = vector.load %arg2[%16, %c0] : memref<16x128xf32, #tpu.memory_space<vmem>>, vector<16x128xf32>
      %18 = arith.index_cast %15 : i32 to index
      %c0_8 = arith.constant 0 : index
      %19 = vector.load %arg3[%18, %c0_8] : memref<16x128xf32, #tpu.memory_space<vmem>>, vector<16x128xf32>
      %20 = arith.subf %17, %19 : vector<16x128xf32>
      %21 = arith.mulf %20, %20 : vector<16x128xf32>
      %22 = tpu.iota {dimensions = array<i32: 0>} : vector<16x1xi32>
      %c16_i32_9 = arith.constant 16 : i32
      %23 = arith.muli %c0_i32_6, %c16_i32_9 : i32
      %24 = vector.broadcast %23 : i32 to vector<16x1xi32>
      %25 = arith.addi %22, %24 : vector<16x1xi32>
      %26 = vector.broadcast %6 : i32 to vector<16x1xi32>
      %27 = arith.cmpi slt, %25, %26 : vector<16x1xi32>
      %cst_10 = arith.constant 0.000000e+00 : f32
      %28 = vector.shape_cast %27 : vector<16x1xi1> to vector<16x1xi1>
      %29 = vector.broadcast %28 : vector<16x1xi1> to vector<16x128xi1>
      %30 = vector.broadcast %cst_10 : f32 to vector<16x128xf32>
      %31 = arith.select %29, %21, %30 : vector<16x128xi1>, vector<16x128xf32>
      %32 = vector.shape_cast %31 : vector<16x128xf32> to vector<2x8x128xf32>
      %cst_11 = arith.constant dense<0.000000e+00> : vector<8x128xf32>
      %33 = vector.multi_reduction <add>, %32, %cst_11 [0] : vector<2x8x128xf32> to vector<8x128xf32>
      %34 = arith.addf %7, %33 : vector<8x128xf32>
      %c1_i32_12 = arith.constant 1 : i32
      %c0_13 = arith.constant 0 : index
      %c0_14 = arith.constant 0 : index
      %35 = vector.load %arg4[%c0_13, %c0_14] : memref<8x128xf32, #tpu.memory_space<vmem>>, vector<8x128xf32>
      %36 = arith.addf %35, %34 : vector<8x128xf32>
      %c0_15 = arith.constant 0 : index
      %c0_16 = arith.constant 0 : index
      %37 = vector.load %arg4[%c0_15, %c0_16] : memref<8x128xf32, #tpu.memory_space<vmem>>, vector<8x128xf32>
      tpu.vector_store %arg4[%c0_15, %c0_16], %36 {strides = array<i32>} : memref<8x128xf32, #tpu.memory_space<vmem>>, vector<8x128xf32>,
    } else {
    }
    return
  }
  func.func @transform_0(%arg0: i32, %arg1: i32) -> (i32, i32) {
    %c1_i32 = arith.constant 1 : i32
    %0 = arith.muli %arg0, %c1_i32 : i32
    %1 = arith.addi %0, %arg1 : i32
    %c0_i32 = arith.constant 0 : i32
    %2 = arith.minsi %1, %c0_i32 : i32
    %c0_i32_0 = arith.constant 0 : i32
    %c0_i32_1 = arith.constant 0 : i32
    return %2, %c0_i32_0 : i32, i32
  }
  func.func @transform_1(%arg0: i32, %arg1: i32) -> (i32, i32) {
    %c1_i32 = arith.constant 1 : i32
    %0 = arith.muli %arg0, %c1_i32 : i32
    %1 = arith.addi %0, %arg1 : i32
    %c0_i32 = arith.constant 0 : i32
    %2 = arith.minsi %1, %c0_i32 : i32
    %c0_i32_0 = arith.constant 0 : i32
    %c0_i32_1 = arith.constant 0 : i32
    return %2, %c0_i32_0 : i32, i32
  }
  func.func @transform_2(%arg0: i32, %arg1: i32) -> (i32, i32) {
    %c0_i32 = arith.constant 0 : i32
    %c0_i32_0 = arith.constant 0 : i32
    return %arg0, %c0_i32 : i32, i32
  }
}

</mosaic_0001>

<llo_original>
// kernel: tpu_custom_call.1
$region0: #{tpu_custom_call.1}
  #allocation0 [shape = 'u32[]', space=smem, size = 0x4, offset = 0x4, fixed_abs, tag = 'smem constant byte address 0x4 - core index']
  #allocation1 [shape = 'u32[72,128]{1,0:T(1,128)}', space=vmem, size = 0x9000, scoped, tag = 'internal scratch']
  %s0 = inlined_call_operand.hbm [shape: f32[16,128], index: 0, kind: input, shape index: {}]
  %s1 = inlined_call_operand.hbm [shape: f32[16,128], index: 1, kind: input, shape index: {}]
  %s2 = inlined_call_operand.hbm [shape: f32[8,128], index: 2, kind: output, shape index: {}]
  %s3 = sld [smem:[#allocation0]]
  $region38: #{tpu_custom_call.1} parent=0
    _
  %s5 = ssub.s32 1, %s3
  %s6 = scalar_select 0, %s5, %s3
  $region1: #{tpu_custom_call.1} parent=0
    #allocation2 [shape = 'u8[8192]{0}', space=vmem, size = 0x2000, scoped, tag = 'input window, operand 0, single buffered']
    #allocation3 [shape = 's32[1]{0}', space=sflag, size = 0x4, scoped, tag = 'scoped memory for tpu_custom_call.1']
    #allocation4 [shape = 's32[1]{0}', space=sflag, size = 0x4, scoped, tag = 'scoped memory for tpu_custom_call.1']
    #allocation5 [shape = 'u8[8192]{0}', space=vmem, size = 0x2000, scoped, tag = 'input window, operand 1, single buffered']
    #allocation6 [shape = 's32[1]{0}', space=sflag, size = 0x4, scoped, tag = 'scoped memory for tpu_custom_call.1']
    #allocation7 [shape = 'u8[4096]{0}', space=vmem, size = 0x1000, scoped, tag = 'output window, operand 0, single buffered']
    %7 = vsyncpa [#allocation3], 0
    %8 = vsyncpa [#allocation6], 0
    %9 = vsyncpa [#allocation4], 0
    // Predicated region
    $region2: #{tpu_custom_call.1} parent=1 // pred_check
      _
    $region3: #{tpu_custom_call.1} parent=1 // pred_check_branch
      %11 = sbr.rel (0) target = $region5
    $region4: #{tpu_custom_call.1} parent=1 // pred_region
      %s12 = sadd.s32 0, 0
      %p13 = scmp.lt.s32.totalorder %s12, 0
      %s14 = scalar_select %p13, %s12, 0
      %s15 = smul.u32 2, %s14
      %17 = vsyncadd [#allocation3], 0
      %s18 = smul.addr %s15, 8
      %s19 = scalar_lea.hbm %s0, %s18
      %s20 = sshll.u32 %s19, 4
      %s21 = int_to_ptr.hbm [resolvable:$true] %s20
      %s22 = sshll.u32 [#allocation2], 4
      %s23 = int_to_ptr.vmem [resolvable:$true] %s22
      %28 = dma.hbm_to_vmem [thread:$0]  %s21, 256, %s23, [#allocation3], 128, 128, 8
    $region5: #{tpu_custom_call.1} parent=1 // pred_fallthru
      _
    // Predicated region
    $region6: #{tpu_custom_call.1} parent=1 // pred_check
      _
    $region7: #{tpu_custom_call.1} parent=1 // pred_check_branch
      %30 = sbr.rel (0) target = $region9
    $region8: #{tpu_custom_call.1} parent=1 // pred_region
      %s31 = sadd.s32 0, 0
      %p32 = scmp.lt.s32.totalorder %s31, 0
      %s33 = scalar_select %p32, %s31, 0
      %s34 = smul.u32 2, %s33
      %36 = vsyncadd [#allocation6], 0
      %s37 = smul.addr %s34, 8
      %s38 = scalar_lea.hbm %s1, %s37
      %s39 = sshll.u32 %s38, 4
      %s40 = int_to_ptr.hbm [resolvable:$true] %s39
      %s41 = sshll.u32 [#allocation5], 4
      %s42 = int_to_ptr.vmem [resolvable:$true] %s41
      %47 = dma.hbm_to_vmem [thread:$0]  %s40, 256, %s42, [#allocation6], 128, 128, 8
    $region9: #{tpu_custom_call.1} parent=1 // pred_fallthru
      _
    // Predicated region
    $region10: #{tpu_custom_call.1} parent=1 // pred_check
      _
    $region11: #{tpu_custom_call.1} parent=1 // pred_check_branch
      %49 = sbr.rel (0) target = $region13
    $region12: #{tpu_custom_call.1} parent=1 // pred_region
      %51 = dma.done [#allocation3], 256
    $region13: #{tpu_custom_call.1} parent=1 // pred_fallthru
      _
    // Predicated region
    $region14: #{tpu_custom_call.1} parent=1 // pred_check
      _
    $region15: #{tpu_custom_call.1} parent=1 // pred_check_branch
      %53 = sbr.rel (0) target = $region17
    $region16: #{tpu_custom_call.1} parent=1 // pred_region
      %55 = dma.done [#allocation6], 256
    $region17: #{tpu_custom_call.1} parent=1 // pred_fallthru
      _
    %s56 = sadd.s32 0, 0
    %p57 = scmp.lt.s32.totalorder %s56, 0
    %s58 = scalar_select %p57, %s56, 0
    %s59 = smul.u32 2, %s58
    %s60 = sadd.s32 0, 0
    %p61 = scmp.lt.s32.totalorder %s60, 0
    %s62 = scalar_select %p61, %s60, 0
    %s63 = smul.u32 2, %s62
    %p64 = scmp.eq.s32.totalorder 0, 0
    // Predicated region
    $region18: #{tpu_custom_call.1} parent=1 // pred_check
      %p65 = pneg %p64
    $region19: #{tpu_custom_call.1} parent=1 // pred_check_branch
      %67 = sbr.rel (%p65) target = $region21
    $region20: #{tpu_custom_call.1} parent=1 // pred_region
      %68 = vst [vmem:[#allocation7] sm:$0xff] 0.0
    $region21: #{tpu_custom_call.1} parent=1 // pred_fallthru
      _
    %s69 = sadd.s32 0, 0
    %s70 = smul.u32 %s69, 16
    %s71 = ssub.s32 16, %s70
    %p72 = scmp.ge.s32.totalorder %s71, 16
    // Predicated region
    $region22: #{tpu_custom_call.1} parent=1 // pred_check
      %p73 = pneg %p72
    $region23: #{tpu_custom_call.1} parent=1 // pred_check_branch
      %75 = sbr.rel (%p73) target = $region25
    $region24: #{tpu_custom_call.1} parent=1 // pred_region
      %v76 = vld [vmem:[#allocation2] sm:$0xff]
      %v77 = vld [vmem:[#allocation2 + $0x8] sm:$0xff]
      %v78 = vld [vmem:[#allocation5] sm:$0xff]
      %v79 = vld [vmem:[#allocation5 + $0x8] sm:$0xff]
      %v80 = vsub.f32 %v76, %v78
      %v81 = vsub.f32 %v77, %v79
      %v82 = vmul.f32 %v80, %v80
      %v83 = vmul.f32 %v81, %v81
      %v84 = vadd.f32 %v82, %v83
      %v85 = vadd.f32 %v84, 0.0
      %v86 = vld [vmem:[#allocation7] sm:$0xff]
      %v87 = vadd.f32 %v86, %v85
      %88 = vst [vmem:[#allocation7] sm:$0xff] %v87
    $region25: #{tpu_custom_call.1} parent=1 // pred_fallthru
      _
    %p89 = scmp.lt.s32.totalorder %s71, 16
    // Predicated region
    $region26: #{tpu_custom_call.1} parent=1 // pred_check
      %p90 = pneg %p89
    $region27: #{tpu_custom_call.1} parent=1 // pred_check_branch
      %92 = sbr.rel (%p90) target = $region29
    $region28: #{tpu_custom_call.1} parent=1 // pred_region
      %v93 = vld [vmem:[#allocation2] sm:$0xff]
      %v94 = vld [vmem:[#allocation2 + $0x8] sm:$0xff]
      %v95 = vld [vmem:[#allocation5] sm:$0xff]
      %v96 = vld [vmem:[#allocation5 + $0x8] sm:$0xff]
      %v97 = vsub.f32 %v93, %v95
      %v98 = vsub.f32 %v94, %v96
      %v99 = vmul.f32 %v97, %v97
      %v100 = vmul.f32 %v98, %v98
      %v101 = vlaneseq
      %v102 = vshrl.u32 %v101, 7
      %v103 = vadd.s32 %v102, 8
      %v104 = vstv %s71
      %vm105 = vcmp.lt.s32.totalorder %v102, %v104
      %vm106 = vcmp.lt.s32.totalorder %v103, %v104
      %v107 = vsel %vm105, 1, 0
      %v108 = vsel %vm106, 1, 0
      %vm109 = vcmp.eq.s32.totalorder %v107, 1
      %vm110 = vcmp.eq.s32.totalorder %v108, 1
      %v111 = vsel %vm109, %v99, 0.0
      %v112 = vsel %vm110, %v100, 0.0
      %v113 = vadd.f32 %v111, %v112
      %v114 = vadd.f32 %v113, 0.0
      %v115 = vld [vmem:[#allocation7] sm:$0xff]
      %v116 = vadd.f32 %v115, %v114
      %117 = vst [vmem:[#allocation7] sm:$0xff] %v116
    $region29: #{tpu_custom_call.1} parent=1 // pred_fallthru
      _
    // Predicated region
    $region30: #{tpu_custom_call.1} parent=1 // pred_check
      _
    $region31: #{tpu_custom_call.1} parent=1 // pred_check_branch
      %119 = sbr.rel (0) target = $region33
    $region32: #{tpu_custom_call.1} parent=1 // pred_region
      %121 = vsyncadd [#allocation4], 0
      %s123 = sshll.u32 [#allocation7], 4
      %s124 = int_to_ptr.vmem [resolvable:$true] %s123
      %s125 = sshll.u32 %s2, 4
      %s126 = int_to_ptr.hbm [resolvable:$true] %s125
      %128 = dma.vmem_to_hbm [thread:$0]  %s124, 128, %s126, [#allocation4]
    $region33: #{tpu_custom_call.1} parent=1 // pred_fallthru
      _
    // Predicated region
    $region34: #{tpu_custom_call.1} parent=1 // pred_check
      _
    $region35: #{tpu_custom_call.1} parent=1 // pred_check_branch
      %130 = sbr.rel (0) target = $region37
    $region36: #{tpu_custom_call.1} parent=1 // pred_region
      %132 = dma.done [#allocation4], 128
    $region37: #{tpu_custom_call.1} parent=1 // pred_fallthru
      _
    %133 = vsyncpa [#allocation3], 1
    %134 = vsyncpa [#allocation6], 1
    %135 = vsyncpa [#allocation4], 1

</llo_original>
